<compile_context>
chip_gen: v6e
topology: v6e:2x2x1
jax: 0.10.0
libtpu: 0.0.40
codegen_flags: <defaults>
</compile_context>

<pallas_src>
import numpy as np
import jax
import jax.numpy as jnp
from jax import lax
from jax.experimental import pallas as pl
from jax.experimental.pallas import tpu as pltpu

LANE = 128


def fused_embedding_kernel(ids_ref, tab_ref, out_ref):
    # ids_ref : (TN, 3) int32 fused-vocab row ids
    #           [word_id, Vw + pos1_id, Vw + Vp + pos2_id]; any id outside
    #           [0, Vf) (padding rows / invalid inputs) hits no table row.
    # tab_ref : (Vf, D_pad) bf16 block-diagonal fused table, lane-padded to a
    #           multiple of 128, resident in VMEM across the whole grid.
    # out_ref : (TN, D_pad) f32, lane-dense -> unmasked full-lane stores.
    tn = ids_ref.shape[0]
    vf = tab_ref.shape[0]
    iota = lax.broadcasted_iota(jnp.int32, (tn, vf), 1)
    # Three hot positions per row, in disjoint vocab ranges -> logical OR.
    hit = ids_ref[:, 0:1] == iota
    hit = jnp.logical_or(hit, ids_ref[:, 1:2] == iota)
    hit = jnp.logical_or(hit, ids_ref[:, 2:3] == iota)
    onehot = hit.astype(jnp.bfloat16)          # 0/1: exact in bf16
    # Single bf16 MXU matmul == the three embedding lookups + concat(dim=2).
    out_ref[...] = jnp.dot(onehot, tab_ref[...],
                           preferred_element_type=jnp.float32)


def build_fused_embedding_table(word_table, pos1_table, pos2_table,
                                dtype=jnp.bfloat16):
    """Init-time (call once, not per forward): block-diagonal fused table.

    Feature axis is zero-padded to a multiple of 128 so kernel stores are
    lane-dense; cast to bf16 for the fast MXU path (values bf16-rounded).
    """
    Vw, Dw = word_table.shape
    Vp, Dp = pos1_table.shape
    assert pos2_table.shape == (Vp, Dp)
    D = Dw + 2 * Dp
    D_pad = max(LANE, pl.cdiv(D, LANE) * LANE)
    Vf = Vw + 2 * Vp
    tab = jnp.zeros((Vf, D_pad), dtype)
    tab = tab.at[:Vw, :Dw].set(word_table.astype(dtype))
    tab = tab.at[Vw:Vw + Vp, Dw:Dw + Dp].set(pos1_table.astype(dtype))
    tab = tab.at[Vw + Vp:, Dw + Dp:D].set(pos2_table.astype(dtype))
    return tab, (Vw, Vp, Dw, Dp)


def _choose_token_tile(n, max_tile=512):
    """Token-tile rows: multiple of 8, <= max_tile (caps the live (TN, Vf)
    one-hot), preferably dividing n (no pad rows / token-axis slice) and
    giving >= 2 grid tiles so v7x's two TensorCores both get work."""
    best = 0
    t = 8
    while t <= min(n // 2, max_tile):
        if n % t == 0:
            best = t
        t += 8
    if best:
        return best                       # divides n, >= 2 tiles
    if n % 8 == 0 and n <= max_tile:
        return n                          # too small to split: single tile
    # Ragged n: ~two tiles, rounded up to the sublane multiple.
    return min(max_tile, ((n + 1) // 2 + 7) // 8 * 8)


def cnn_sentence_encoder_forward(word, pos1, pos2, fused_table, dims):
    """Pallas implementation of CNNSentenceEncoder.forward (== Embedding)."""
    Vw, Vp, Dw, Dp = dims
    D = Dw + 2 * Dp
    Vf, D_pad = fused_table.shape
    B, L = word.shape
    N = B * L

    # Per-field range check, then fused-vocab offset.  Out-of-range ids map to
    # -1 -> no one-hot hit -> zero embedding row (torch raises IndexError).
    def _fuse(idx, hi, off):
        idx = idx.reshape(-1).astype(jnp.int32)
        ok = (idx >= 0) & (idx < hi)
        return jnp.where(ok, idx + off, -1)

    ids = jnp.stack([
        _fuse(word, Vw, 0),
        _fuse(pos1, Vp, Vw),
        _fuse(pos2, Vp, Vw + Vp),
    ], axis=1)                                            # (N, 3) int32

    TN = _choose_token_tile(N)
    N_pad = pl.cdiv(N, TN) * TN
    if N_pad > N:  # only when no divisor tile exists; pad rows -> zero output
        ids = jnp.concatenate(
            [ids, jnp.full((N_pad - N, 3), -1, jnp.int32)], axis=0)

    out = pl.pallas_call(
        fused_embedding_kernel,
        out_shape=jax.ShapeDtypeStruct((N_pad, D_pad), jnp.float32),
        grid=(N_pad // TN,),
        in_specs=[
            pl.BlockSpec((TN, 3), lambda t: (t, 0)),      # packed ids per tile
            # Constant index_map: fused table is fetched once and stays
            # VMEM-resident across all token tiles.  For large Vf prefer the
            # HBM-gather path (see TODO at top) over growing this table.
            pl.BlockSpec((Vf, D_pad), lambda t: (0, 0)),
        ],
        out_specs=pl.BlockSpec((TN, D_pad), lambda t: (t, 0)),
        compiler_params=pltpu.CompilerParams(
            dimension_semantics=("parallel",)),
    )(ids, fused_table)

    if N_pad > N:
        out = out[:N]
    return out[:, :D].reshape(B, L, D)


if __name__ == "__main__":
    # Small shapes consistent with the module.
    B = 2                      # batch
    max_length = 16            # sequence length
    word_embedding_dim = 16
    pos_embedding_dim = 8
    vocab = 30                 # rows of word_vec_mat; table adds UNK + BLK rows

    key = jax.random.PRNGKey(0)
    k_vec, k_unk, k_p1, k_p2, k_w, k_1, k_2 = jax.random.split(key, 7)

    # --- deterministic parameter init (mirrors Embedding.__init__) ---
    word_vec_mat = jax.random.normal(k_vec, (vocab, word_embedding_dim),
                                     dtype=jnp.float32)
    unk = jax.random.uniform(k_unk, (1, word_embedding_dim),
                             minval=-0.5, maxval=0.5, dtype=jnp.float32)
    blk = jnp.zeros((1, word_embedding_dim), dtype=jnp.float32)
    word_table = jnp.concatenate([word_vec_mat, unk, blk], axis=0)  # (vocab+2, Dw)

    pos1_table = jax.random.normal(k_p1, (2 * max_length, pos_embedding_dim),
                                   dtype=jnp.float32).at[0].set(0.0)
    pos2_table = jax.random.normal(k_p2, (2 * max_length, pos_embedding_dim),
                                   dtype=jnp.float32).at[0].set(0.0)

    # --- init-time fused table (hoisted out of forward) ---
    fused_table, dims = build_fused_embedding_table(
        word_table, pos1_table, pos2_table)

    # --- deterministic example inputs (dict keys 'word','pos1','pos2') ---
    word = jax.random.randint(k_w, (B, max_length), 0, vocab + 2, dtype=jnp.int32)
    pos1 = jax.random.randint(k_1, (B, max_length), 0, 2 * max_length, dtype=jnp.int32)
    pos2 = jax.random.randint(k_2, (B, max_length), 0, 2 * max_length, dtype=jnp.int32)

    forward = jax.jit(cnn_sentence_encoder_forward, static_argnames=("dims",))
    out = forward(word, pos1, pos2, fused_table, dims=dims)
    out = jax.block_until_ready(out)

    D = word_embedding_dim + 2 * pos_embedding_dim
    assert out.shape == (B, max_length, D)

    # Reference 1: exact expected result given the bf16-rounded tables used by
    # the kernel (the one-hot lookup itself is exact).
    wt_b = word_table.astype(jnp.bfloat16).astype(jnp.float32)
    p1_b = pos1_table.astype(jnp.bfloat16).astype(jnp.float32)
    p2_b = pos2_table.astype(jnp.bfloat16).astype(jnp.float32)
    ref_bf16 = jnp.concatenate([
        jnp.take(wt_b, word, axis=0),
        jnp.take(p1_b, pos1, axis=0),
        jnp.take(p2_b, pos2, axis=0),
    ], axis=2)
    np.testing.assert_allclose(np.asarray(out), np.asarray(ref_bf16),
                               rtol=1e-6, atol=1e-6)

    # Reference 2: original f32 semantics; only bf16 rounding of table values
    # separates the kernel from it.
    ref_f32 = jnp.concatenate([
        jnp.take(word_table, word, axis=0),
        jnp.take(pos1_table, pos1, axis=0),
        jnp.take(pos2_table, pos2, axis=0),
    ], axis=2)
    np.testing.assert_allclose(np.asarray(out), np.asarray(ref_f32),
                               rtol=2e-2, atol=2e-2)

    print("KERNEL_OK")
</pallas_src>

<mosaic_0001>
module attributes {stable_mosaic.version = 11 : i64} {
  func.func @fused_embedding_kernel(%arg0: i32, %arg1: memref<16x3xi32, #tpu.memory_space<vmem>>, %arg2: memref<96x128xbf16, #tpu.memory_space<vmem>>, %arg3: memref<16x128xf32, #tpu.memory_space<vmem>>) attributes {dimension_semantics = [#tpu.dimension_semantics<parallel>], iteration_bounds = array<i64: 2>, scalar_prefetch = 0 : i64, scratch_operands = 0 : i64, tpu.core_type = #tpu.core_type<tc>, window_params = [{transform_indices = @transform_0, window_bounds = array<i64: 16, 3>}, {pipeline_mode = #tpu.pipeline_mode<synchronous>, transform_indices = @transform_1, window_bounds = array<i64: 96, 128>}, {transform_indices = @transform_2, window_bounds = array<i64: 16, 128>}]} {
    %0 = tpu.iota {dimensions = array<i32: 1>} : vector<16x96xi32>
    %c0 = arith.constant 0 : index
    %c0_0 = arith.constant 0 : index
    %1 = vector.load %arg1[%c0, %c0_0] : memref<16x3xi32, #tpu.memory_space<vmem>>, vector<16x1xi32>
    %2 = vector.broadcast %1 : vector<16x1xi32> to vector<16x96xi32>
    %3 = arith.cmpi eq, %2, %0 : vector<16x96xi32>
    %c0_1 = arith.constant 0 : index
    %c1 = arith.constant 1 : index
    %4 = vector.load %arg1[%c0_1, %c1] : memref<16x3xi32, #tpu.memory_space<vmem>>, vector<16x1xi32>
    %5 = vector.broadcast %4 : vector<16x1xi32> to vector<16x96xi32>
    %6 = arith.cmpi eq, %5, %0 : vector<16x96xi32>
    %7 = arith.ori %3, %6 : vector<16x96xi1>
    %c0_2 = arith.constant 0 : index
    %c2 = arith.constant 2 : index
    %8 = vector.load %arg1[%c0_2, %c2] : memref<16x3xi32, #tpu.memory_space<vmem>>, vector<16x1xi32>
    %9 = vector.broadcast %8 : vector<16x1xi32> to vector<16x96xi32>
    %10 = arith.cmpi eq, %9, %0 : vector<16x96xi32>
    %11 = arith.ori %7, %10 : vector<16x96xi1>
    %12 = arith.extui %11 : vector<16x96xi1> to vector<16x96xi32>
    %13 = arith.sitofp %12 : vector<16x96xi32> to vector<16x96xf32>
    %14 = arith.truncf %13 : vector<16x96xf32> to vector<16x96xbf16>
    %c0_3 = arith.constant 0 : index
    %c0_4 = arith.constant 0 : index
    %15 = vector.load %arg2[%c0_3, %c0_4] : memref<96x128xbf16, #tpu.memory_space<vmem>>, vector<96x128xbf16>
    %cst = arith.constant dense<0.000000e+00> : vector<16x128xf32>
    %16 = tpu.matmul %14, %15, %cst {dimension_numbers = #tpu.dot_dimension_numbers<[1], [0], [0], [1], [0, 0, 1, 1], [], []>} : vector<16x96xbf16>, vector<96x128xbf16>, vector<16x128xf32> -> vector<16x128xf32>
    %c0_5 = arith.constant 0 : index
    %c0_6 = arith.constant 0 : index
    %17 = vector.load %arg3[%c0_5, %c0_6] : memref<16x128xf32, #tpu.memory_space<vmem>>, vector<16x128xf32>
    tpu.vector_store %arg3[%c0_5, %c0_6], %16 {strides = array<i32>} : memref<16x128xf32, #tpu.memory_space<vmem>>, vector<16x128xf32>,
    return
  }
  func.func @transform_0(%arg0: i32) -> (i32, i32) {
    %c0_i32 = arith.constant 0 : i32
    %c0_i32_0 = arith.constant 0 : i32
    return %arg0, %c0_i32 : i32, i32
  }
  func.func @transform_1(%arg0: i32) -> (i32, i32) {
    %c0_i32 = arith.constant 0 : i32
    %c0_i32_0 = arith.constant 0 : i32
    %c0_i32_1 = arith.constant 0 : i32
    return %c0_i32, %c0_i32_0 : i32, i32
  }
  func.func @transform_2(%arg0: i32) -> (i32, i32) {
    %c0_i32 = arith.constant 0 : i32
    %c0_i32_0 = arith.constant 0 : i32
    return %arg0, %c0_i32 : i32, i32
  }
}

</mosaic_0001>

<llo_original>
// kernel: cnn_sentence_encoder_forward.1
$region0: #{cnn_sentence_encoder_forward.1}
  #allocation0 [shape = 'u32[]', space=smem, size = 0x4, offset = 0x4, fixed_abs, tag = 'smem constant byte address 0x4 - core index']
  #allocation1 [shape = 'u32[144,128]{1,0:T(1,128)}', space=vmem, size = 0x12000, scoped, tag = 'internal scratch']
  %s0 = inlined_call_operand.vmem [shape: s32[32,3], index: 0, kind: input, shape index: {}]
  %s1 = inlined_call_operand.vmem [shape: bf16[96,128], index: 1, kind: input, shape index: {}]
  %s2 = inlined_call_operand.hbm [shape: f32[32,128], index: 2, kind: output, shape index: {}]
  %s3 = sld [smem:[#allocation0]]
  $region41: #{cnn_sentence_encoder_forward.1} parent=0
    _
  %s5 = ssub.s32 1, %s3
  %s6 = scalar_select 0, %s5, %s3
  $region1: #{cnn_sentence_encoder_forward.1} parent=0
    #allocation2 [shape = 'u8[16384]{0}', space=vmem, size = 0x4000, scoped, tag = 'output window, operand 0']
    #allocation3 [shape = 's32[2]{0}', space=sflag, size = 0x8, scoped, tag = 'scoped memory for cnn_sentence_encoder_forward.1']
    %7 = vsyncpa [#allocation3], 0
    %s8 = scalar_lea.sflag [#allocation3], 1
    %9 = vsyncpa %s8, 0
    loop: start=0, step=1, limit=4
    $region2: #{cnn_sentence_encoder_forward.1} parent=1 // loop_pre_header
      _
    $region3: #{cnn_sentence_encoder_forward.1} parent=1 // loop_header
      %s11 = sphi 0, %s15
      %p12 = scmp.ge.s32.totalorder %s11, 4
      %s21 = sphi 0, %s23
      %s24 = sphi 0, %s21
      %s25 = sphi 0, %s24
      %s41 = sphi 0, %s25
      %s45 = sphi 0, %s45
      %s47 = sphi 0, %s45
      %s48 = sphi 0, %s47
      %s62 = sphi 0, %s48
      %s68 = sphi 0, %s70
      %s71 = sphi 0, %s68
      %s72 = sphi 0, %s71
      %s88 = sphi 0, %s72
    $region4: #{cnn_sentence_encoder_forward.1} parent=1 // loop_header_branch
      %14 = sbr.rel (%p12) target = $region8
    $region5: #{cnn_sentence_encoder_forward.1} parent=1 // loop_body
      %s16 = ssub.s32 %s11, 1
      %s17 = ssub.s32 %s11, 2
      %s18 = sadd.s32 %s11, 1
      %s19 = ssub.s32 %s11, %s18
      %p20 = scmp.eq.s32.totalorder %s19, 0
      %s22 = sadd.s32 %s21, 1
      %s23 = scalar_select %p20, %s21, %s22
      %p26 = pneg %p20
      %p27 = scmp.eq.s32.totalorder %s11, 1
      %p28 = por %p26, %p27
      %p29 = scmp.ne.s32.totalorder %s21, %s24
      %p30 = scmp.eq.s32.totalorder %s11, 0
      %p31 = por %p29, %p30
      %p32 = scmp.ne.s32.totalorder %s21, %s24
      %p33 = scmp.eq.s32.totalorder %s16, 1
      %p34 = por %p32, %p33
      %p35 = scmp.ne.s32.totalorder %s24, %s25
      %p36 = scmp.eq.s32.totalorder %s16, 0
      %p37 = por %p35, %p36
      %p38 = scmp.ne.s32.totalorder %s24, %s25
      %p39 = scmp.eq.s32.totalorder %s17, 1
      %p40 = por %p38, %p39
      %p42 = scmp.ne.s32.totalorder %s25, %s41
      %p43 = scmp.eq.s32.totalorder %s17, 0
      %p44 = por %p42, %p43
      %s46 = sadd.s32 %s45, 1
      %p49 = scmp.eq.s32.totalorder %s11, 1
      %p50 = scmp.ne.s32.totalorder %s45, %s47
      %p51 = scmp.eq.s32.totalorder %s11, 0
      %p52 = por %p50, %p51
      %p53 = scmp.ne.s32.totalorder %s45, %s47
      %p54 = scmp.eq.s32.totalorder %s16, 1
      %p55 = por %p53, %p54
      %p56 = scmp.ne.s32.totalorder %s47, %s48
      %p57 = scmp.eq.s32.totalorder %s16, 0
      %p58 = por %p56, %p57
      %p59 = scmp.ne.s32.totalorder %s47, %s48
      %p60 = scmp.eq.s32.totalorder %s17, 1
      %p61 = por %p59, %p60
      %p63 = scmp.ne.s32.totalorder %s48, %s62
      %p64 = scmp.eq.s32.totalorder %s17, 0
      %p65 = por %p63, %p64
      %s66 = ssub.s32 %s11, %s18
      %p67 = scmp.eq.s32.totalorder %s66, 0
      %s69 = sadd.s32 %s68, 1
      %s70 = scalar_select %p67, %s68, %s69
      %p73 = pneg %p67
      %p74 = scmp.eq.s32.totalorder %s11, 1
      %p75 = por %p73, %p74
      %p76 = scmp.ne.s32.totalorder %s68, %s71
      %p77 = scmp.eq.s32.totalorder %s11, 0
      %p78 = por %p76, %p77
      %p79 = scmp.ne.s32.totalorder %s68, %s71
      %p80 = scmp.eq.s32.totalorder %s16, 1
      %p81 = por %p79, %p80
      %p82 = scmp.ne.s32.totalorder %s71, %s72
      %p83 = scmp.eq.s32.totalorder %s16, 0
      %p84 = por %p82, %p83
      %p85 = scmp.ne.s32.totalorder %s71, %s72
      %p86 = scmp.eq.s32.totalorder %s17, 1
      %p87 = por %p85, %p86
      %p89 = scmp.ne.s32.totalorder %s72, %s88
      %p90 = scmp.eq.s32.totalorder %s17, 0
      %p91 = por %p89, %p90
      %p92 = scmp.le.s32.totalorder 1, %s11
      %p93 = scmp.lt.s32.totalorder %s11, 3
      %p94 = pnand %p92, %p93
      %p95 = pneg %p94
      // Predicated region
      $region9: #{cnn_sentence_encoder_forward.1} parent=5 // pred_check
        _
      $region10: #{cnn_sentence_encoder_forward.1} parent=5 // pred_check_branch
        %97 = sbr.rel (%p94) target = $region12
      $region11: #{cnn_sentence_encoder_forward.1} parent=5 // pred_region
        %s98 = ssub.s32 %s11, 1
        // Predicated region
        $region13: #{cnn_sentence_encoder_forward.1} parent=11 // pred_check
          %p99 = pneg %p58
        $region14: #{cnn_sentence_encoder_forward.1} parent=11 // pred_check_branch
          %101 = sbr.rel (%p99) target = $region16
        $region15: #{cnn_sentence_encoder_forward.1} parent=11 // pred_region
          _
        $region16: #{cnn_sentence_encoder_forward.1} parent=11 // pred_fallthru
          _
      $region12: #{cnn_sentence_encoder_forward.1} parent=5 // pred_fallthru
        _
      %p102 = scmp.lt.s32.totalorder %s11, 2
      // Predicated region
      $region17: #{cnn_sentence_encoder_forward.1} parent=5 // pred_check
        %p103 = pneg %p102
      $region18: #{cnn_sentence_encoder_forward.1} parent=5 // pred_check_branch
        %105 = sbr.rel (%p103) target = $region20
      $region19: #{cnn_sentence_encoder_forward.1} parent=5 // pred_region
        // Predicated region
        $region21: #{cnn_sentence_encoder_forward.1} parent=19 // pred_check
          %p106 = pneg %p31
        $region22: #{cnn_sentence_encoder_forward.1} parent=19 // pred_check_branch
          %108 = sbr.rel (%p106) target = $region24
        $region23: #{cnn_sentence_encoder_forward.1} parent=19 // pred_region
          %s109 = smul.u32 2, %s11
          %p110 = scmp.lt.s32.totalorder %s109, 3
          %s111 = scalar_select %p110, %s109, 3
          %s112 = smul.addr %s111, 8
          %s113 = scalar_lea.vmem %s0, %s112
          %s114 = smul.u32 2, %s11
        $region24: #{cnn_sentence_encoder_forward.1} parent=19 // pred_fallthru
          _
      $region20: #{cnn_sentence_encoder_forward.1} parent=5 // pred_fallthru
        _
      %p115 = scmp.le.s32.totalorder 1, %s11
      %p116 = scmp.lt.s32.totalorder %s11, 3
      %p117 = pnand %p115, %p116
      %p118 = pneg %p117
      // Predicated region
      $region25: #{cnn_sentence_encoder_forward.1} parent=5 // pred_check
        _
      $region26: #{cnn_sentence_encoder_forward.1} parent=5 // pred_check_branch
        %120 = sbr.rel (%p117) target = $region28
      $region27: #{cnn_sentence_encoder_forward.1} parent=5 // pred_region
        %s121 = ssub.s32 %s11, 1
        %s122 = smul.u32 2, %s16
        %p123 = scmp.lt.s32.totalorder %s122, 3
        %s124 = scalar_select %p123, %s122, 3
        %s125 = smul.addr %s124, 8
        %s126 = scalar_lea.vmem %s0, %s125
        %p127 = pneg %p37
        %p128 = pneg %p34
        %p129 = pneg %p58
        %p130 = pneg %p55
        %p131 = pneg %p84
        %p132 = pneg %p81
        %s133 = sand.u32 %s71, 1
        %s134 = scalar_lea.sflag [#allocation3], %s133
        %s135 = sand.u32 %s71, 1
        %s136 = smul.addr %s135, 16
        %s137 = scalar_lea.vmem [#allocation2], %s136
        %s138 = smul.u32 2, %s16
        %p139 = scmp.lt.s32.totalorder %s138, 3
        %s140 = scalar_select %p139, %s138, 3
        %s141 = smul.addr %s140, 8
        %s142 = scalar_lea.vmem %s0, %s141
        %s143 = smul.u32 2, %s16
        %s144 = smul.u32 2, %s16
        %v146 = vlaneseq
        %v147 = vand.u32 %v146, 127
        %v148 = vld [vmem:[%s142] sm:$0xff]
        %v149 = vld [vmem:[%s142 + $0x8] sm:$0xff]
        %150 = vset.pattern.permute.xlu0 0
        %151 = vperm.xlu0 %150, %v148
        %v152 = vpop.permute.xlu0 %151
        %153 = vset.pattern.permute.xlu0 0
        %154 = vperm.xlu0 %153, %v149
        %v155 = vpop.permute.xlu0 %154
        %vm156 = vcmp.eq.s32.totalorder %v152, %v147
        %vm157 = vcmp.eq.s32.totalorder %v155, %v147
        %158 = vset.pattern.permute.xlu0 1
        %159 = vperm.xlu0 %158, %v148
        %v160 = vpop.permute.xlu0 %159
        %161 = vset.pattern.permute.xlu0 1
        %162 = vperm.xlu0 %161, %v149
        %v163 = vpop.permute.xlu0 %162
        %vm164 = vcmp.eq.s32.totalorder %v160, %v147
        %vm165 = vcmp.eq.s32.totalorder %v163, %v147
        %vm166 = vmor %vm156, %vm164
        %vm167 = vmor %vm157, %vm165
        %168 = vset.pattern.permute.xlu0 2
        %169 = vperm.xlu0 %168, %v148
        %v170 = vpop.permute.xlu0 %169
        %171 = vset.pattern.permute.xlu0 2
        %172 = vperm.xlu0 %171, %v149
        %v173 = vpop.permute.xlu0 %172
        %vm174 = vcmp.eq.s32.totalorder %v170, %v147
        %vm175 = vcmp.eq.s32.totalorder %v173, %v147
        %vm176 = vmor %vm166, %vm174
        %vm177 = vmor %vm167, %vm175
        %v178 = vsel %vm176, 1, 0
        %v179 = vsel %vm177, 1, 0
        %v180 = vcvt.s32.f32 %v178
        %v181 = vcvt.s32.f32 %v179
        %v182 = vpack.c.bf16 %v181, %v180
        %v183 = vld [vmem:[%s1] sm:$0xf]
        %v184 = vld [vmem:[%s1 + $0x4] sm:$0xf]
        %v185 = vld [vmem:[%s1 + $0x8] sm:$0xf]
        %v186 = vld [vmem:[%s1 + $0xc] sm:$0xf]
        %v187 = vld [vmem:[%s1 + $0x10] sm:$0xf]
        %v188 = vld [vmem:[%s1 + $0x14] sm:$0xf]
        %v189 = vld [vmem:[%s1 + $0x18] sm:$0xf]
        %v190 = vld [vmem:[%s1 + $0x1c] sm:$0xf]
        %v191 = vld [vmem:[%s1 + $0x20] sm:$0xf]
        %v192 = vld [vmem:[%s1 + $0x24] sm:$0xf]
        %v193 = vld [vmem:[%s1 + $0x28] sm:$0xf]
        %v194 = vld [vmem:[%s1 + $0x2c] sm:$0xf]
        %v207 = vunpack.c.l.b16 %v183
        %v208 = vunpack.c.l.b16 %v184
        %v209 = vunpack.c.l.b16 %v185
        %v210 = vunpack.c.l.b16 %v186
        %v211 = vunpack.c.l.b16 %v187
        %v212 = vunpack.c.l.b16 %v188
        %v213 = vunpack.c.l.b16 %v189
        %v214 = vunpack.c.l.b16 %v190
        %v215 = vunpack.c.l.b16 %v191
        %v216 = vunpack.c.l.b16 %v192
        %v217 = vunpack.c.l.b16 %v193
        %v218 = vunpack.c.l.b16 %v194
        %v219 = vpack.c.b16 %v208, %v207
        %v220 = vpack.c.b16 %v210, %v209
        %v221 = vpack.c.b16 %v212, %v211
        %v222 = vpack.c.b16 %v214, %v213
        %v223 = vpack.c.b16 %v216, %v215
        %v224 = vpack.c.b16 %v218, %v217
        %vm231 = vcmask 785408
        %v233 = vsel %vm231, %v182, 0
        %235 = vmatprep.subr.bf16.mxu0 0
        %236 = vmatpush1.bf16.msra.mxu0 0
        %237 = vmatprep.subr.bf16.mxu0 0
        %238 = vmatpush1.bf16.msra.mxu0 0
        %239 = vmatprep.subr.bf16.mxu0 0
        %240 = vmatpush1.bf16.msra.mxu0 %v224
        %241 = vmatprep.subr.bf16.mxu0 0
        %242 = vmatpush1.bf16.msra.mxu0 %v223
        %243 = vmatprep.subr.bf16.mxu0 0
        %244 = vmatpush1.bf16.msra.mxu0 %v222
        %245 = vmatprep.subr.bf16.mxu0 0
        %246 = vmatpush1.bf16.msra.mxu0 %v221
        %247 = vmatprep.subr.bf16.mxu0 0
        %248 = vmatpush1.bf16.msra.mxu0 %v220
        %249 = vmatprep.subr.bf16.mxu0 0
        %250 = vmatpush1.bf16.msra.mxu0 %v219
        %251 = vmatprep.subr.bf16.mxu0 0
        %252 = vmatpush2.bf16.msra.mxu0 0
        %253 = vmatprep.subr.bf16.mxu0 0
        %254 = vmatpush2.bf16.msra.mxu0 0
        %255 = vmatprep.subr.bf16.mxu0 0
        %256 = vmatpush2.bf16.msra.mxu0 0
        %257 = vmatprep.subr.bf16.mxu0 0
        %258 = vmatpush2.bf16.msra.mxu0 0
        %259 = vmatprep.subr.bf16.mxu0 0
        %260 = vmatpush2.bf16.msra.mxu0 0
        %261 = vmatprep.subr.bf16.mxu0 0
        %262 = vmatpush2.bf16.msra.mxu0 0
        %263 = vmatprep.subr.bf16.mxu0 0
        %264 = vmatpush2.bf16.msra.mxu0 0
        %265 = vmatprep.subr.bf16.mxu0 0
        %266 = vmatpush2.bf16.msra.mxu0 0
        %267 = vmatprep.mubr.bf16.mxu0 0
        %268 = vmatmul.mubr.bf16.gmra.mxu0 %v233
        %v269 = vpop.f32.mrf.mxu0
        %v270 = vadd.f32 0.0, %v269
        %v271 = vpop.f32.mrf.mxu0
        %v272 = vpop.f32.mrf.mxu0
        %v273 = vadd.f32 0.0, %v272
        %v274 = vpop.f32.mrf.mxu0
        %275 = vdwg.mxu0
        %276 = vst [vmem:[%s137] sm:$0xff] %v270
        %277 = vst [vmem:[%s137 + $0x8] sm:$0xff] %v273
        %s278 = sand.u32 %s71, 1
        %s279 = scalar_lea.sflag [#allocation3], %s278
        %s280 = sand.u32 %s71, 1
        %s281 = smul.addr %s280, 16
        %s282 = scalar_lea.vmem [#allocation2], %s281
        // Predicated region
        $region29: #{cnn_sentence_encoder_forward.1} parent=27 // pred_check
          %p283 = pneg %p81
        $region30: #{cnn_sentence_encoder_forward.1} parent=27 // pred_check_branch
          %285 = sbr.rel (%p283) target = $region32
        $region31: #{cnn_sentence_encoder_forward.1} parent=27 // pred_region
          %s286 = smul.u32 2, %s16
          %s288 = ssub.s32 256, 256
          %289 = vsyncadd %s279, %s288
          %s290 = smul.addr %s286, 128
          %s291 = scalar_lea.hbm %s2, %s290
          %s292 = sshll.u32 %s282, 4
          %s293 = int_to_ptr.vmem [resolvable:$true] %s292
          %298 = dma.vmem_to_hbm [thread:$0]  %s293, 256, %s291, %s279, 128, 128, 8
        $region32: #{cnn_sentence_encoder_forward.1} parent=27 // pred_fallthru
          _
      $region28: #{cnn_sentence_encoder_forward.1} parent=5 // pred_fallthru
        _
      %p299 = scmp.le.s32.totalorder 2, %s11
      // Predicated region
      $region33: #{cnn_sentence_encoder_forward.1} parent=5 // pred_check
        %p300 = pneg %p299
      $region34: #{cnn_sentence_encoder_forward.1} parent=5 // pred_check_branch
        %302 = sbr.rel (%p300) target = $region36
      $region35: #{cnn_sentence_encoder_forward.1} parent=5 // pred_region
        %s303 = ssub.s32 %s11, 2
        // Predicated region
        $region37: #{cnn_sentence_encoder_forward.1} parent=35 // pred_check
          %p304 = pneg %p87
        $region38: #{cnn_sentence_encoder_forward.1} parent=35 // pred_check_branch
          %306 = sbr.rel (%p304) target = $region40
        $region39: #{cnn_sentence_encoder_forward.1} parent=35 // pred_region
          %s307 = sand.u32 %s72, 1
          %s308 = scalar_lea.sflag [#allocation3], %s307
          %s309 = sand.u32 %s72, 1
          %s310 = smul.addr %s309, 16
          %s311 = scalar_lea.vmem [#allocation2], %s310
          %312 = dma.done %s308, 256
        $region40: #{cnn_sentence_encoder_forward.1} parent=35 // pred_fallthru
          _
      $region36: #{cnn_sentence_encoder_forward.1} parent=5 // pred_fallthru
        _
    $region6: #{cnn_sentence_encoder_forward.1} parent=1 // loop_footer
      %s15 = sadd.s32 1, %s11
    $region7: #{cnn_sentence_encoder_forward.1} parent=1 // loop_footer_branch
      %10 = sbr.rel target = $region3
    $region8: #{cnn_sentence_encoder_forward.1} parent=1 // loop_exit
      _
    %313 = vsyncpa [#allocation3], 1
    %s314 = scalar_lea.sflag [#allocation3], 1
    %315 = vsyncpa %s314, 1

</llo_original>
